<compile_context>
chip_gen: v7x
topology: tpu7x:2x2x1
jax: 0.10.0
libtpu: 0.0.40
codegen_flags: <defaults>
</compile_context>

<pallas_src>
import functools
import math

import jax
import jax.numpy as jnp
from jax import lax
from jax.experimental import pallas as pl
from jax.experimental.pallas import tpu as pltpu


# ----------------------------------------------------------------------------
# Tiled linear projection:  y = x @ w + b    (x:(M,K), w:(K,N), b:(N,))
# ----------------------------------------------------------------------------
def _linear_kernel(x_ref, w_ref, b_ref, o_ref, acc_ref):
    k = pl.program_id(2)

    @pl.when(k == 0)
    def _():
        acc_ref[...] = jnp.zeros_like(acc_ref)

    acc_ref[...] += jnp.dot(
        x_ref[...], w_ref[...], preferred_element_type=jnp.float32)

    @pl.when(k == pl.num_programs(2) - 1)
    def _():
        o_ref[...] = (acc_ref[...] + b_ref[...]).astype(o_ref.dtype)


def _pick_tile(dim, candidates=(512, 256, 128)):
    # Largest MXU/lane-friendly tile that divides `dim`; otherwise the full
    # extent (always legal).  NOTE: on v6e (128 MiB VMEM) candidates could be
    # extended to 1024 together with an explicit vmem_limit_bytes.
    for c in candidates:
        if dim % c == 0:
            return c
    return dim


def linear(x, w, b, out_dtype=None):
    """y = x @ w + b with a tiled, pipelined Pallas matmul (bf16 MXU, f32 acc)."""
    M, K = x.shape
    Kw, N = w.shape
    assert K == Kw
    out_dtype = out_dtype or x.dtype

    # Harden against huge, non-tile-aligned M: pad so a single full-extent
    # block never has to cover all of M (scoped-VMEM safety on v5e/v7x).
    M0 = M
    if M > 1024 and all(M % c for c in (512, 256, 128)):
        Mp = ((M + 255) // 256) * 256
        x = jnp.pad(x, ((0, Mp - M), (0, 0)))
        M = Mp

    tm, tn, tk = _pick_tile(M), _pick_tile(N), _pick_tile(K)
    grid = (M // tm, N // tn, K // tk)

    out = pl.pallas_call(
        _linear_kernel,
        out_shape=jax.ShapeDtypeStruct((M, N), out_dtype),
        grid=grid,
        in_specs=[
            pl.BlockSpec((tm, tk), lambda i, j, k: (i, k)),
            pl.BlockSpec((tk, tn), lambda i, j, k: (k, j)),
            pl.BlockSpec((1, tn), lambda i, j, k: (0, j)),
        ],
        out_specs=pl.BlockSpec((tm, tn), lambda i, j, k: (i, j)),
        scratch_shapes=[pltpu.VMEM((tm, tn), jnp.float32)],
        compiler_params=pltpu.CompilerParams(
            dimension_semantics=("parallel", "parallel", "arbitrary")),
    )(x, w, b.reshape(1, N).astype(jnp.float32))

    return out[:M0] if M0 != M else out


# ----------------------------------------------------------------------------
# Flash-style multi-head attention on merged-head (B, S, d_model) layout.
# ----------------------------------------------------------------------------
def _attention_kernel(*refs, num_heads, has_mask):
    if has_mask:
        q_ref, k_ref, v_ref, mask_ref, o_ref, m_ref, l_ref, acc_ref = refs
    else:
        q_ref, k_ref, v_ref, o_ref, m_ref, l_ref, acc_ref = refs
        mask_ref = None

    kv_i = pl.program_id(2)

    @pl.when(kv_i == 0)
    def _():
        m_ref[...] = jnp.full_like(m_ref, -jnp.inf)
        l_ref[...] = jnp.zeros_like(l_ref)
        acc_ref[...] = jnp.zeros_like(acc_ref)

    # q already carries the 1/sqrt(depth) scale (folded into wq in the wrapper).
    q_all = q_ref[0]                                   # (tq,  D)  bf16
    k_all = k_ref[0]                                   # (tkv, D)  bf16
    v_all = v_ref[0]                                   # (tkv, D)  bf16

    if has_mask:
        # Additive bias computed ONCE per (b, q-tile, kv-tile), shared by heads.
        bias = mask_ref[0].astype(jnp.float32) * jnp.float32(-1e9)  # (1|tq, tkv)

    depth = q_all.shape[-1] // num_heads

    # Static unroll over heads: all heads of this (batch, q-tile) per grid step.
    for h in range(num_heads):
        lo = h * depth
        q_h = q_all[:, lo:lo + depth]
        k_h = k_all[:, lo:lo + depth]
        v_h = v_all[:, lo:lo + depth]

        # q_h @ k_h^T in NT form (contract last dims), f32 accumulation.
        s = lax.dot_general(
            q_h, k_h, (((1,), (1,)), ((), ())),
            preferred_element_type=jnp.float32)        # (tq, tkv)
        if has_mask:
            s = s + bias

        m_prev = m_ref[h]                              # (tq, 1)
        m_new = jnp.maximum(m_prev, jnp.max(s, axis=-1, keepdims=True))
        alpha = jnp.exp(m_prev - m_new)
        p = jnp.exp(s - m_new)                         # (tq, tkv) f32

        l_ref[h] = alpha * l_ref[h] + jnp.sum(p, axis=-1, keepdims=True)
        acc_ref[h] = alpha * acc_ref[h] + jnp.dot(
            p.astype(v_h.dtype), v_h, preferred_element_type=jnp.float32)
        m_ref[h] = m_new

    @pl.when(kv_i == pl.num_programs(2) - 1)
    def _():
        inv_l = pl.reciprocal(l_ref[...], approx=True)   # (H, tq, 1), EUP slot
        for h in range(num_heads):
            lo = h * depth
            o_ref[0, :, lo:lo + depth] = (
                acc_ref[h] * inv_l[h]).astype(o_ref.dtype)


def attention(q_arr, k_arr, v_arr, mask, num_heads, *,
              d_model, sq, sk, q_col=0, k_col=0, v_col=0):
    """Merged-head flash attention.

    q_arr/k_arr/v_arr: (B, S, D_total) bf16.  In the fused-QKV path the same
    (B, Sq, 3*d_model) array is passed three times with column-block indices
    q_col/k_col/v_col (0/1/2); otherwise D_total == d_model and cols are 0.
    mask: None or any array broadcastable to (B, 1, Sq, Sk).
    """
    B = q_arr.shape[0]
    D = d_model
    assert D % num_heads == 0
    depth = D // num_heads

    # Cap at 256 so double-buffered blocks + f32 scratch fit the default
    # scoped VMEM on v5e (16 MiB) and v7x (32 MiB) without tuning flags.
    tq = _pick_tile(sq, candidates=(256, 128))
    tkv = _pick_tile(sk, candidates=(256, 128))
    grid = (B, sq // tq, sk // tkv)   # batch/q parallel, kv innermost reduction

    def _qkv_spec(col, is_q):
        if is_q:
            return pl.BlockSpec((1, tq, D), lambda b, qi, ki, c=col: (b, qi, c))
        return pl.BlockSpec((1, tkv, D), lambda b, qi, ki, c=col: (b, ki, c))

    in_specs = [_qkv_spec(q_col, True), _qkv_spec(k_col, False),
                _qkv_spec(v_col, False)]
    args = [q_arr, k_arr, v_arr]

    has_mask = mask is not None
    if has_mask:
        m = mask
        while m.ndim < 4:
            m = m[None]
        # Module semantics: the same mask is applied to every head.
        assert m.shape[1] == 1, "per-head masks are not supported"
        if m.shape[-1] == 1:
            m = jnp.broadcast_to(m, m.shape[:-1] + (sk,))
        Bm, _, Sqm, Skm = m.shape
        assert Bm in (1, B) and Sqm in (1, sq) and Skm == sk
        # Compact bf16 mask, broadcast axes kept size-1 (no HBM blowup).
        mask3 = m.reshape(Bm, Sqm, sk).astype(jnp.bfloat16)
        tq_m = tq if Sqm == sq else 1
        bsel = (Bm == B)
        qsel = (Sqm == sq)
        mask_map = lambda b, qi, ki: (b if bsel else 0, qi if qsel else 0, ki)
        in_specs.append(pl.BlockSpec((1, tq_m, tkv), mask_map))
        args.append(mask3)

    kernel = functools.partial(
        _attention_kernel, num_heads=num_heads, has_mask=has_mask)

    return pl.pallas_call(
        kernel,
        out_shape=jax.ShapeDtypeStruct((B, sq, D), q_arr.dtype),
        grid=grid,
        in_specs=in_specs,
        out_specs=pl.BlockSpec((1, tq, D), lambda b, qi, ki: (b, qi, 0)),
        scratch_shapes=[
            pltpu.VMEM((num_heads, tq, 1), jnp.float32),      # running max m
            pltpu.VMEM((num_heads, tq, 1), jnp.float32),      # running sum l
            pltpu.VMEM((num_heads, tq, depth), jnp.float32),  # head-major acc
        ],
        compiler_params=pltpu.CompilerParams(
            dimension_semantics=("parallel", "parallel", "arbitrary")),
    )(*args)


# ----------------------------------------------------------------------------
# Module wrapper (parameters kept in the transposed (in, out) layout).
# ----------------------------------------------------------------------------
def init_mha_params(key, d_model):
    keys = jax.random.split(key, 8)
    scale = 1.0 / math.sqrt(d_model)

    def lin(kw, kb):
        w_t = jax.random.uniform(kw, (d_model, d_model), jnp.float32, -scale, scale)
        b = jax.random.uniform(kb, (d_model,), jnp.float32, -scale, scale)
        return w_t, b

    return {"q": lin(keys[0], keys[1]), "k": lin(keys[2], keys[3]),
            "v": lin(keys[4], keys[5]), "out": lin(keys[6], keys[7])}


def multihead_attention(params, inputs, num_heads, compute_dtype=jnp.bfloat16):
    query, key, value, mask = (inputs["query"], inputs["key"],
                               inputs["value"], inputs["mask"])
    B, Sq, d_model = query.shape
    Sk = key.shape[1]
    assert d_model % num_heads == 0
    depth = d_model // num_heads
    scale = 1.0 / math.sqrt(depth)

    (wq, bq), (wk, bk), (wv, bv), (wo, bo) = (
        params["q"], params["k"], params["v"], params["out"])

    # Fold 1/sqrt(depth) into the q projection in f32 (precision + no
    # per-kv-step multiply inside the attention kernel).
    wq_s = wq * jnp.float32(scale)
    bq_s = bq * jnp.float32(scale)

    fused = (query is key) and (key is value) and (d_model % 128 == 0)
    if fused:
        # Self-attention fast path: one fused (d_model, 3*d_model) projection.
        # The slab is reshaped (free) and consumed by the attention kernel via
        # column-block index_maps — no XLA slice copies of the activations.
        w_qkv = jnp.concatenate([wq_s, wk, wv], axis=1).astype(compute_dtype)
        b_qkv = jnp.concatenate([bq_s, bk, bv], axis=0)
        x = query.reshape(B * Sq, d_model).astype(compute_dtype)
        qkv = linear(x, w_qkv, b_qkv, out_dtype=compute_dtype)
        qkv = qkv.reshape(B, Sq, 3 * d_model)
        q_arr = k_arr = v_arr = qkv
        q_col, k_col, v_col = 0, 1, 2
    else:
        q_arr = linear(query.reshape(B * Sq, d_model).astype(compute_dtype),
                       wq_s.astype(compute_dtype), bq_s,
                       out_dtype=compute_dtype).reshape(B, Sq, d_model)
        k_arr = linear(key.reshape(B * Sk, d_model).astype(compute_dtype),
                       wk.astype(compute_dtype), bk,
                       out_dtype=compute_dtype).reshape(B, Sk, d_model)
        v_arr = linear(value.reshape(B * Sk, d_model).astype(compute_dtype),
                       wv.astype(compute_dtype), bv,
                       out_dtype=compute_dtype).reshape(B, Sk, d_model)
        q_col = k_col = v_col = 0

    attn = attention(q_arr, k_arr, v_arr, mask, num_heads,
                     d_model=d_model, sq=Sq, sk=Sk,
                     q_col=q_col, k_col=k_col, v_col=v_col)   # (B, Sq, d_model)

    out = linear(attn.reshape(B * Sq, d_model),
                 wo.astype(compute_dtype), bo, out_dtype=jnp.float32)
    return out.reshape(B, Sq, d_model)


# Pure-JAX f32 reference (mirrors the PyTorch module exactly).
def multihead_attention_ref(params, inputs, num_heads):
    query, key, value, mask = (inputs["query"], inputs["key"],
                               inputs["value"], inputs["mask"])
    B, Sq, d_model = query.shape
    Sk = key.shape[1]
    depth = d_model // num_heads

    def lin(x, p):
        return x @ p[0] + p[1]

    q = lin(query, params["q"]).reshape(B, Sq, num_heads, depth).transpose(0, 2, 1, 3)
    k = lin(key, params["k"]).reshape(B, Sk, num_heads, depth).transpose(0, 2, 1, 3)
    v = lin(value, params["v"]).reshape(B, Sk, num_heads, depth).transpose(0, 2, 1, 3)
    logits = jnp.einsum("bhqd,bhkd->bhqk", q, k) / math.sqrt(depth)
    if mask is not None:
        logits = logits + mask * (-1e9)
    w = jax.nn.softmax(logits, axis=-1)
    attn = jnp.einsum("bhqk,bhkd->bhqd", w, v)
    concat = attn.transpose(0, 2, 1, 3).reshape(B, Sq, d_model)
    return lin(concat, params["out"])


if __name__ == "__main__":
    # Matches the real model's d_model (256); small batch/seq for the test.
    D_MODEL, NUM_HEADS, B = 256, 8, 2

    root = jax.random.PRNGKey(0)
    k_param, k_x, k_q2, k_kv2 = jax.random.split(root, 4)
    params = init_mha_params(k_param, D_MODEL)

    # ---- Test 1: self-attention (fused QKV path), causal mask (1,1,S,S) ----
    S = 8
    x = jax.random.normal(k_x, (B, S, D_MODEL), jnp.float32)
    causal = (1.0 - jnp.tril(jnp.ones((S, S), jnp.float32)))[None, None]
    inputs1 = {"query": x, "key": x, "value": x, "mask": causal}

    out1 = jax.block_until_ready(multihead_attention(params, inputs1, NUM_HEADS))
    ref1 = multihead_attention_ref(params, inputs1, NUM_HEADS)
    assert out1.shape == (B, S, D_MODEL)
    err1 = float(jnp.max(jnp.abs(out1 - ref1)))
    assert jnp.allclose(out1, ref1, atol=5e-2, rtol=5e-2), (
        f"self-attention mismatch vs reference, max abs err {err1}")

    # ---- Test 2: cross-attention (Sk != Sq), key-padding mask (B,1,1,Sk) ---
    Sq, Sk = 8, 16
    q_in = jax.random.normal(k_q2, (B, Sq, D_MODEL), jnp.float32)
    kv_in = jax.random.normal(k_kv2, (B, Sk, D_MODEL), jnp.float32)
    pad = (jnp.arange(Sk) >= 12).astype(jnp.float32)      # mask last 4 keys
    mask2 = jnp.broadcast_to(pad[None, None, None, :], (B, 1, 1, Sk))
    inputs2 = {"query": q_in, "key": kv_in, "value": kv_in, "mask": mask2}

    out2 = jax.block_until_ready(multihead_attention(params, inputs2, NUM_HEADS))
    ref2 = multihead_attention_ref(params, inputs2, NUM_HEADS)
    assert out2.shape == (B, Sq, D_MODEL)
    err2 = float(jnp.max(jnp.abs(out2 - ref2)))
    assert jnp.allclose(out2, ref2, atol=5e-2, rtol=5e-2), (
        f"cross-attention mismatch vs reference, max abs err {err2}")

    # ---- Test 3: self-attention, mask=None (no-mask kernel variant) --------
    inputs3 = {"query": x, "key": x, "value": x, "mask": None}
    out3 = jax.block_until_ready(multihead_attention(params, inputs3, NUM_HEADS))
    ref3 = multihead_attention_ref(params, inputs3, NUM_HEADS)
    err3 = float(jnp.max(jnp.abs(out3 - ref3)))
    assert jnp.allclose(out3, ref3, atol=5e-2, rtol=5e-2), (
        f"no-mask self-attention mismatch vs reference, max abs err {err3}")

    print("KERNEL_OK")
</pallas_src>

<mosaic_0001>
module attributes {stable_mosaic.version = 11 : i64} {
  func.func @_linear_kernel(%arg0: i32, %arg1: i32, %arg2: i32, %arg3: memref<16x256xbf16, #tpu.memory_space<vmem>>, %arg4: memref<256x256xbf16, #tpu.memory_space<vmem>>, %arg5: memref<1x256xf32, #tpu.memory_space<vmem>>, %arg6: memref<16x256xbf16, #tpu.memory_space<vmem>>, %arg7: memref<16x256xf32, #tpu.memory_space<vmem>>) attributes {dimension_semantics = [#tpu.dimension_semantics<parallel>, #tpu.dimension_semantics<parallel>, #tpu.dimension_semantics<arbitrary>], iteration_bounds = array<i64: 1, 3, 1>, scalar_prefetch = 0 : i64, scratch_operands = 1 : i64, tpu.core_type = #tpu.core_type<tc>, window_params = [{transform_indices = @transform_0, window_bounds = array<i64: 16, 256>}, {transform_indices = @transform_1, window_bounds = array<i64: 256, 256>}, {transform_indices = @transform_2, window_bounds = array<i64: 1, 256>}, {transform_indices = @transform_3, window_bounds = array<i64: 16, 256>}]} {
    %c0_i32 = arith.constant 0 : i32
    %0 = arith.cmpi eq, %arg2, %c0_i32 : i32
    %1 = arith.extui %0 : i1 to i32
    %c0_i32_0 = arith.constant 0 : i32
    %2 = arith.cmpi ne, %1, %c0_i32_0 : i32
    scf.if %2 {
      %cst_10 = arith.constant 0.000000e+00 : f32
      %12 = vector.broadcast %cst_10 : f32 to vector<16x256xf32>
      %c0_11 = arith.constant 0 : index
      %c0_12 = arith.constant 0 : index
      %13 = vector.load %arg7[%c0_11, %c0_12] : memref<16x256xf32, #tpu.memory_space<vmem>>, vector<16x256xf32>
      tpu.vector_store %arg7[%c0_11, %c0_12], %12 {strides = array<i32>} : memref<16x256xf32, #tpu.memory_space<vmem>>, vector<16x256xf32>,
    } else {
    }
    %c0 = arith.constant 0 : index
    %c0_1 = arith.constant 0 : index
    %3 = vector.load %arg7[%c0, %c0_1] : memref<16x256xf32, #tpu.memory_space<vmem>>, vector<16x256xf32>
    %c0_2 = arith.constant 0 : index
    %c0_3 = arith.constant 0 : index
    %4 = vector.load %arg3[%c0_2, %c0_3] : memref<16x256xbf16, #tpu.memory_space<vmem>>, vector<16x256xbf16>
    %c0_4 = arith.constant 0 : index
    %c0_5 = arith.constant 0 : index
    %5 = vector.load %arg4[%c0_4, %c0_5] : memref<256x256xbf16, #tpu.memory_space<vmem>>, vector<256x256xbf16>
    %cst = arith.constant dense<0.000000e+00> : vector<16x256xf32>
    %6 = tpu.matmul %4, %5, %cst {dimension_numbers = #tpu.dot_dimension_numbers<[1], [0], [0], [1], [0, 0, 1, 1], [], []>} : vector<16x256xbf16>, vector<256x256xbf16>, vector<16x256xf32> -> vector<16x256xf32>
    %7 = arith.addf %3, %6 : vector<16x256xf32>
    %c0_6 = arith.constant 0 : index
    %c0_7 = arith.constant 0 : index
    %8 = vector.load %arg7[%c0_6, %c0_7] : memref<16x256xf32, #tpu.memory_space<vmem>>, vector<16x256xf32>
    tpu.vector_store %arg7[%c0_6, %c0_7], %7 {strides = array<i32>} : memref<16x256xf32, #tpu.memory_space<vmem>>, vector<16x256xf32>,
    %c0_i32_8 = arith.constant 0 : i32
    %9 = arith.cmpi eq, %arg2, %c0_i32_8 : i32
    %10 = arith.extui %9 : i1 to i32
    %c0_i32_9 = arith.constant 0 : i32
    %11 = arith.cmpi ne, %10, %c0_i32_9 : i32
    scf.if %11 {
      %c0_10 = arith.constant 0 : index
      %c0_11 = arith.constant 0 : index
      %12 = vector.load %arg7[%c0_10, %c0_11] : memref<16x256xf32, #tpu.memory_space<vmem>>, vector<16x256xf32>
      %c0_12 = arith.constant 0 : index
      %c0_13 = arith.constant 0 : index
      %13 = vector.load %arg5[%c0_12, %c0_13] : memref<1x256xf32, #tpu.memory_space<vmem>>, vector<1x256xf32>
      %14 = vector.broadcast %13 : vector<1x256xf32> to vector<16x256xf32>
      %15 = arith.addf %12, %14 : vector<16x256xf32>
      %16 = arith.truncf %15 : vector<16x256xf32> to vector<16x256xbf16>
      %c0_14 = arith.constant 0 : index
      %c0_15 = arith.constant 0 : index
      %17 = vector.load %arg6[%c0_14, %c0_15] : memref<16x256xbf16, #tpu.memory_space<vmem>>, vector<16x256xbf16>
      tpu.vector_store %arg6[%c0_14, %c0_15], %16 {strides = array<i32>} : memref<16x256xbf16, #tpu.memory_space<vmem>>, vector<16x256xbf16>,
    } else {
    }
    return
  }
  func.func @transform_0(%arg0: i32, %arg1: i32, %arg2: i32) -> (i32, i32) {
    %c0_i32 = arith.constant 0 : i32
    return %arg0, %arg2 : i32, i32
  }
  func.func @transform_1(%arg0: i32, %arg1: i32, %arg2: i32) -> (i32, i32) {
    %c0_i32 = arith.constant 0 : i32
    return %arg2, %arg1 : i32, i32
  }
  func.func @transform_2(%arg0: i32, %arg1: i32, %arg2: i32) -> (i32, i32) {
    %c0_i32 = arith.constant 0 : i32
    %c0_i32_0 = arith.constant 0 : i32
    return %c0_i32, %arg1 : i32, i32
  }
  func.func @transform_3(%arg0: i32, %arg1: i32, %arg2: i32) -> (i32, i32) {
    %c0_i32 = arith.constant 0 : i32
    return %arg0, %arg1 : i32, i32
  }
}

</mosaic_0001>

<llo_original>
// kernel: tpu_custom_call.1
$region0: #{tpu_custom_call.1}
  #allocation0 [shape = 'u32[]', space=smem, size = 0x4, offset = 0x4, fixed_abs, tag = 'smem constant byte address 0x4 - core index']
  #allocation1 [shape = 'u32[144,128]{1,0:T(1,128)}', space=vmem, size = 0x12000, scoped, tag = 'internal scratch']
  #allocation2 [shape = 'f32[16,256]{1,0:T(8,128)}', space=vmem, size = 0x4000, scoped, tag = 'scratch operand']
  %s0 = inlined_call_operand.hbm [shape: bf16[16,256], index: 0, kind: input, shape index: {}]
  %s1 = inlined_call_operand.hbm [shape: bf16[256,768], index: 1, kind: input, shape index: {}]
  %s2 = inlined_call_operand.vmem [shape: f32[1,768], index: 2, kind: input, shape index: {}]
  %s3 = inlined_call_operand.hbm [shape: bf16[16,768], index: 3, kind: output, shape index: {}]
  %s4 = sld [smem:[#allocation0]]
  $region61: #{tpu_custom_call.1} parent=0
    _
  %s6 = ssub.s32 1, %s4
  %s7 = scalar_select 0, %s6, %s4
  $region1: #{tpu_custom_call.1} parent=0
    #allocation3 [shape = 'u8[8192]{0}', space=vmem, size = 0x2000, scoped, tag = 'input window, operand 0, single buffered']
    #allocation4 [shape = 's32[2]{0}', space=sflag, size = 0x8, scoped, tag = 'scoped memory for tpu_custom_call.1']
    #allocation5 [shape = 's32[2]{0}', space=sflag, size = 0x8, scoped, tag = 'scoped memory for tpu_custom_call.1']
    #allocation6 [shape = 'u8[262144]{0}', space=vmem, size = 0x40000, scoped, tag = 'input window, operand 1']
    #allocation7 [shape = 's32[2]{0}', space=sflag, size = 0x8, scoped, tag = 'scoped memory for tpu_custom_call.1']
    #allocation8 [shape = 'u8[16384]{0}', space=vmem, size = 0x4000, scoped, tag = 'output window, operand 0']
    %8 = vsyncpa [#allocation4], 0
    %9 = vsyncpa [#allocation7], 0
    %s10 = scalar_lea.sflag [#allocation7], 1
    %11 = vsyncpa %s10, 0
    %12 = vsyncpa [#allocation5], 0
    %s13 = scalar_lea.sflag [#allocation5], 1
    %14 = vsyncpa %s13, 0
    loop: start=0, step=1, limit=5
    $region2: #{tpu_custom_call.1} parent=1 // loop_pre_header
      _
    $region3: #{tpu_custom_call.1} parent=1 // loop_header
      %s16 = sphi 0, %s20
      %p17 = scmp.ge.s32.totalorder %s16, 5
      %s23 = sphi 0, %s42
      %s24 = sphi 0, %s38
      %s25 = sphi 0, %s34
      %s26 = sphi 0, %s23
      %s27 = sphi 0, %s24
      %s28 = sphi 0, %s25
      %s29 = sphi 0, %s26
      %s30 = sphi 0, %s27
      %s31 = sphi 0, %s28
      %s47 = sphi 0, %s49
      %s50 = sphi 0, %s47
      %s51 = sphi 0, %s50
      %s67 = sphi 0, %s51
      %s75 = sphi 0, %s77
      %s78 = sphi 0, %s75
      %s79 = sphi 0, %s78
      %s95 = sphi 0, %s79
      %s101 = sphi 0, %s103
      %s104 = sphi 0, %s101
      %s105 = sphi 0, %s104
      %s121 = sphi 0, %s105
      %s129 = sphi 0, %s131
      %s132 = sphi 0, %s129
      %s133 = sphi 0, %s132
      %s149 = sphi 0, %s133
    $region4: #{tpu_custom_call.1} parent=1 // loop_header_branch
      %19 = sbr.rel (%p17) target = $region8
    $region5: #{tpu_custom_call.1} parent=1 // loop_body
      %s21 = ssub.s32 %s16, 1
      %s22 = ssub.s32 %s16, 2
      %s32 = sadd.s32 1, %s25
      %p33 = scmp.ge.s32.totalorder %s32, 1
      %s34 = scalar_select %p33, 0, %s32
      %s35 = sadd.s32 1, %s24
      %s36 = scalar_select %p33, %s35, %s24
      %p37 = scmp.ge.s32.totalorder %s36, 3
      %s38 = scalar_select %p37, 0, %s36
      %s39 = sadd.s32 1, %s23
      %s40 = scalar_select %p37, %s39, %s23
      %p41 = scmp.ge.s32.totalorder %s40, 1
      %s42 = scalar_select %p41, 0, %s40
      %s43 = ssub.s32 %s23, %s42
      %s44 = ssub.s32 %s25, %s34
      %s45 = sor.u32 %s43, %s44
      %p46 = scmp.eq.s32.totalorder %s45, 0
      %s48 = sadd.s32 %s47, 1
      %s49 = scalar_select %p46, %s47, %s48
      %p52 = pneg %p46
      %p53 = scmp.eq.s32.totalorder %s16, 2
      %p54 = por %p52, %p53
      %p55 = scmp.ne.s32.totalorder %s47, %s50
      %p56 = scmp.eq.s32.totalorder %s16, 0
      %p57 = por %p55, %p56
      %p58 = scmp.ne.s32.totalorder %s47, %s50
      %p59 = scmp.eq.s32.totalorder %s21, 2
      %p60 = por %p58, %p59
      %p61 = scmp.ne.s32.totalorder %s50, %s51
      %p62 = scmp.eq.s32.totalorder %s21, 0
      %p63 = por %p61, %p62
      %p64 = scmp.ne.s32.totalorder %s50, %s51
      %p65 = scmp.eq.s32.totalorder %s22, 2
      %p66 = por %p64, %p65
      %p68 = scmp.ne.s32.totalorder %s51, %s67
      %p69 = scmp.eq.s32.totalorder %s22, 0
      %p70 = por %p68, %p69
      %s71 = ssub.s32 %s25, %s34
      %s72 = ssub.s32 %s24, %s38
      %s73 = sor.u32 %s71, %s72
      %p74 = scmp.eq.s32.totalorder %s73, 0
      %s76 = sadd.s32 %s75, 1
      %s77 = scalar_select %p74, %s75, %s76
      %p80 = pneg %p74
      %p81 = scmp.eq.s32.totalorder %s16, 2
      %p82 = por %p80, %p81
      %p83 = scmp.ne.s32.totalorder %s75, %s78
      %p84 = scmp.eq.s32.totalorder %s16, 0
      %p85 = por %p83, %p84
      %p86 = scmp.ne.s32.totalorder %s75, %s78
      %p87 = scmp.eq.s32.totalorder %s21, 2
      %p88 = por %p86, %p87
      %p89 = scmp.ne.s32.totalorder %s78, %s79
      %p90 = scmp.eq.s32.totalorder %s21, 0
      %p91 = por %p89, %p90
      %p92 = scmp.ne.s32.totalorder %s78, %s79
      %p93 = scmp.eq.s32.totalorder %s22, 2
      %p94 = por %p92, %p93
      %p96 = scmp.ne.s32.totalorder %s79, %s95
      %p97 = scmp.eq.s32.totalorder %s22, 0
      %p98 = por %p96, %p97
      %s99 = ssub.s32 %s24, %s38
      %p100 = scmp.eq.s32.totalorder %s99, 0
      %s102 = sadd.s32 %s101, 1
      %s103 = scalar_select %p100, %s101, %s102
      %p106 = pneg %p100
      %p107 = scmp.eq.s32.totalorder %s16, 2
      %p108 = por %p106, %p107
      %p109 = scmp.ne.s32.totalorder %s101, %s104
      %p110 = scmp.eq.s32.totalorder %s16, 0
      %p111 = por %p109, %p110
      %p112 = scmp.ne.s32.totalorder %s101, %s104
      %p113 = scmp.eq.s32.totalorder %s21, 2
      %p114 = por %p112, %p113
      %p115 = scmp.ne.s32.totalorder %s104, %s105
      %p116 = scmp.eq.s32.totalorder %s21, 0
      %p117 = por %p115, %p116
      %p118 = scmp.ne.s32.totalorder %s104, %s105
      %p119 = scmp.eq.s32.totalorder %s22, 2
      %p120 = por %p118, %p119
      %p122 = scmp.ne.s32.totalorder %s105, %s121
      %p123 = scmp.eq.s32.totalorder %s22, 0
      %p124 = por %p122, %p123
      %s125 = ssub.s32 %s23, %s42
      %s126 = ssub.s32 %s24, %s38
      %s127 = sor.u32 %s125, %s126
      %p128 = scmp.eq.s32.totalorder %s127, 0
      %s130 = sadd.s32 %s129, 1
      %s131 = scalar_select %p128, %s129, %s130
      %p134 = pneg %p128
      %p135 = scmp.eq.s32.totalorder %s16, 2
      %p136 = por %p134, %p135
      %p137 = scmp.ne.s32.totalorder %s129, %s132
      %p138 = scmp.eq.s32.totalorder %s16, 0
      %p139 = por %p137, %p138
      %p140 = scmp.ne.s32.totalorder %s129, %s132
      %p141 = scmp.eq.s32.totalorder %s21, 2
      %p142 = por %p140, %p141
      %p143 = scmp.ne.s32.totalorder %s132, %s133
      %p144 = scmp.eq.s32.totalorder %s21, 0
      %p145 = por %p143, %p144
      %p146 = scmp.ne.s32.totalorder %s132, %s133
      %p147 = scmp.eq.s32.totalorder %s22, 2
      %p148 = por %p146, %p147
      %p150 = scmp.ne.s32.totalorder %s133, %s149
      %p151 = scmp.eq.s32.totalorder %s22, 0
      %p152 = por %p150, %p151
      %p153 = scmp.le.s32.totalorder 1, %s16
      %p154 = scmp.lt.s32.totalorder %s16, 4
      %p155 = pnand %p153, %p154
      %p156 = pneg %p155
      // Predicated region
      $region9: #{tpu_custom_call.1} parent=5 // pred_check
        _
      $region10: #{tpu_custom_call.1} parent=5 // pred_check_branch
        %158 = sbr.rel (%p155) target = $region12
      $region11: #{tpu_custom_call.1} parent=5 // pred_region
        %s159 = ssub.s32 %s16, 1
        // Predicated region
        $region13: #{tpu_custom_call.1} parent=11 // pred_check
          %p160 = pneg %p63
        $region14: #{tpu_custom_call.1} parent=11 // pred_check_branch
          %162 = sbr.rel (%p160) target = $region16
        $region15: #{tpu_custom_call.1} parent=11 // pred_region
          %s163 = smul.u32 2, %s26
          %s164 = smul.u32 2, %s28
          %s166 = ssub.s32 256, 256
          %167 = vsyncadd [#allocation4], %s166
          %s168 = smul.addr %s163, 2
          %s169 = sadd.s32 %s164, %s168
          %s170 = smul.addr %s169, 64
          %s171 = scalar_lea.hbm %s0, %s170
          %s172 = sshll.u32 [#allocation3], 4
          %s173 = int_to_ptr.vmem [resolvable:$true] %s172
          %178 = dma.hbm_to_vmem [thread:$0]  %s171, 256, %s173, [#allocation4], 128, 128, 8
        $region16: #{tpu_custom_call.1} parent=11 // pred_fallthru
          _
      $region12: #{tpu_custom_call.1} parent=5 // pred_fallthru
        _
      %p179 = scmp.lt.s32.totalorder %s16, 3
      // Predicated region
      $region17: #{tpu_custom_call.1} parent=5 // pred_check
        %p180 = pneg %p179
      $region18: #{tpu_custom_call.1} parent=5 // pred_check_branch
        %182 = sbr.rel (%p180) target = $region20
      $region19: #{tpu_custom_call.1} parent=5 // pred_region
        // Predicated region
        $region21: #{tpu_custom_call.1} parent=19 // pred_check
          %p183 = pneg %p85
        $region22: #{tpu_custom_call.1} parent=19 // pred_check_branch
          %185 = sbr.rel (%p183) target = $region24
        $region23: #{tpu_custom_call.1} parent=19 // pred_region
          %s186 = sand.u32 %s75, 1
          %s187 = scalar_lea.sflag [#allocation7], %s186
          %s188 = sand.u32 %s75, 1
          %s189 = smul.addr %s188, 256
          %s190 = scalar_lea.vmem [#allocation6], %s189
          %s191 = smul.u32 32, %s25
          %s192 = smul.u32 2, %s24
          %s194 = ssub.s32 4096, 4096
          %195 = vsyncadd %s187, %s194
          %s196 = smul.addr %s191, 6
          %s197 = sadd.s32 %s192, %s196
          %s198 = smul.addr %s197, 64
          %s199 = scalar_lea.hbm %s1, %s198
          %s200 = sshll.u32 %s190, 4
          %s201 = int_to_ptr.vmem [resolvable:$true] %s200
          %206 = dma.hbm_to_vmem [thread:$0]  %s199, 4096, %s201, %s187, 384, 128, 8
        $region24: #{tpu_custom_call.1} parent=19 // pred_fallthru
          _
        // Predicated region
        $region25: #{tpu_custom_call.1} parent=19 // pred_check
          %p207 = pneg %p111
        $region26: #{tpu_custom_call.1} parent=19 // pred_check_branch
          %209 = sbr.rel (%p207) target = $region28
        $region27: #{tpu_custom_call.1} parent=19 // pred_region
          %s210 = smul.u32 2, %s24
          %p211 = scmp.lt.s32.totalorder %s210, 5
          %s212 = scalar_select %p211, %s210, 5
          %s213 = scalar_lea.vmem %s2, %s212
          %s214 = smul.u32 2, %s24
        $region28: #{tpu_custom_call.1} parent=19 // pred_fallthru
          _
      $region20: #{tpu_custom_call.1} parent=5 // pred_fallthru
        _
      %p215 = scmp.le.s32.totalorder 1, %s16
      %p216 = scmp.lt.s32.totalorder %s16, 4
      %p217 = pnand %p215, %p216
      %p218 = pneg %p217
      // Predicated region
      $region29: #{tpu_custom_call.1} parent=5 // pred_check
        _
      $region30: #{tpu_custom_call.1} parent=5 // pred_check_branch
        %220 = sbr.rel (%p217) target = $region32
      $region31: #{tpu_custom_call.1} parent=5 // pred_region
        %s221 = ssub.s32 %s16, 1
        // Predicated region
        $region33: #{tpu_custom_call.1} parent=31 // pred_check
          %p222 = pneg %p63
        $region34: #{tpu_custom_call.1} parent=31 // pred_check_branch
          %224 = sbr.rel (%p222) target = $region36
        $region35: #{tpu_custom_call.1} parent=31 // pred_region
          %225 = dma.done [#allocation4], 256
        $region36: #{tpu_custom_call.1} parent=31 // pred_fallthru
          _
        %s226 = sand.u32 %s78, 1
        %s227 = scalar_lea.sflag [#allocation7], %s226
        %s228 = sand.u32 %s78, 1
        %s229 = smul.addr %s228, 256
        %s230 = scalar_lea.vmem [#allocation6], %s229
        // Predicated region
        $region37: #{tpu_custom_call.1} parent=31 // pred_check
          %p231 = pneg %p91
        $region38: #{tpu_custom_call.1} parent=31 // pred_check_branch
          %233 = sbr.rel (%p231) target = $region40
        $region39: #{tpu_custom_call.1} parent=31 // pred_region
          %234 = dma.done %s227, 4096
        $region40: #{tpu_custom_call.1} parent=31 // pred_fallthru
          _
        %p235 = pneg %p63
        %p236 = pneg %p60
        %s237 = sand.u32 %s78, 1
        %s238 = scalar_lea.sflag [#allocation7], %s237
        %s239 = sand.u32 %s78, 1
        %s240 = smul.addr %s239, 256
        %s241 = scalar_lea.vmem [#allocation6], %s240
        %p242 = pneg %p91
        %p243 = pneg %p88
        %s244 = smul.u32 2, %s27
        %p245 = scmp.lt.s32.totalorder %s244, 5
        %s246 = scalar_select %p245, %s244, 5
        %s247 = scalar_lea.vmem %s2, %s246
        %p248 = pneg %p117
        %p249 = pneg %p114
        %p250 = pneg %p145
        %p251 = pneg %p142
        %s252 = sand.u32 %s132, 1
        %s253 = scalar_lea.sflag [#allocation5], %s252
        %s254 = sand.u32 %s132, 1
        %s255 = smul.addr %s254, 16
        %s256 = scalar_lea.vmem [#allocation8], %s255
        %s257 = smul.u32 2, %s26
        %s258 = smul.u32 2, %s28
        %s259 = smul.u32 32, %s28
        %s260 = smul.u32 2, %s27
        %s261 = smul.u32 2, %s27
        %p262 = scmp.lt.s32.totalorder %s261, 5
        %s263 = scalar_select %p262, %s261, 5
        %s264 = scalar_lea.vmem %s2, %s263
        %s265 = smul.u32 2, %s27
        %s266 = smul.u32 2, %s26
        %s267 = smul.u32 2, %s27
        %p268 = scmp.eq.s32.totalorder %s28, 0
        // Predicated region
        $region41: #{tpu_custom_call.1} parent=31 // pred_check
          %p269 = pneg %p268
        $region42: #{tpu_custom_call.1} parent=31 // pred_check_branch
          %271 = sbr.rel (%p269) target = $region44
        $region43: #{tpu_custom_call.1} parent=31 // pred_region
          %272 = vst [vmem:[#allocation2] sm:$0xff] 0.0
          %273 = vst [vmem:[#allocation2 + $0x8] sm:$0xff] 0.0
          %274 = vst [vmem:[#allocation2 + $0x10] sm:$0xff] 0.0
          %275 = vst [vmem:[#allocation2 + $0x18] sm:$0xff] 0.0
        $region44: #{tpu_custom_call.1} parent=31 // pred_fallthru
          _
        %v276 = vld [vmem:[#allocation2] sm:$0xff]
        %v277 = vld [vmem:[#allocation2 + $0x8] sm:$0xff]
        %v278 = vld [vmem:[#allocation2 + $0x10] sm:$0xff]
        %v279 = vld [vmem:[#allocation2 + $0x18] sm:$0xff]
        %v280 = vld [vmem:[#allocation3] sm:$0xff]
        %v281 = vld [vmem:[#allocation3 + $0x8] sm:$0xff]
        %v282 = vld [vmem:[%s230] sm:$0xff]
        %v283 = vld [vmem:[%s230 + $0x8] sm:$0xff]
        %v284 = vld [vmem:[%s230 + $0x10] sm:$0xff]
        %v285 = vld [vmem:[%s230 + $0x18] sm:$0xff]
        %v286 = vld [vmem:[%s230 + $0x20] sm:$0xff]
        %v287 = vld [vmem:[%s230 + $0x28] sm:$0xff]
        %v288 = vld [vmem:[%s230 + $0x30] sm:$0xff]
        %v289 = vld [vmem:[%s230 + $0x38] sm:$0xff]
        %v290 = vld [vmem:[%s230 + $0x40] sm:$0xff]
        %v291 = vld [vmem:[%s230 + $0x48] sm:$0xff]
        %v292 = vld [vmem:[%s230 + $0x50] sm:$0xff]
        %v293 = vld [vmem:[%s230 + $0x58] sm:$0xff]
        %v294 = vld [vmem:[%s230 + $0x60] sm:$0xff]
        %v295 = vld [vmem:[%s230 + $0x68] sm:$0xff]
        %v296 = vld [vmem:[%s230 + $0x70] sm:$0xff]
        %v297 = vld [vmem:[%s230 + $0x78] sm:$0xff]
        %v298 = vld [vmem:[%s230 + $0x80] sm:$0xff]
        %v299 = vld [vmem:[%s230 + $0x88] sm:$0xff]
        %v300 = vld [vmem:[%s230 + $0x90] sm:$0xff]
        %v301 = vld [vmem:[%s230 + $0x98] sm:$0xff]
        %v302 = vld [vmem:[%s230 + $0xa0] sm:$0xff]
        %v303 = vld [vmem:[%s230 + $0xa8] sm:$0xff]
        %v304 = vld [vmem:[%s230 + $0xb0] sm:$0xff]
        %v305 = vld [vmem:[%s230 + $0xb8] sm:$0xff]
        %v306 = vld [vmem:[%s230 + $0xc0] sm:$0xff]
        %v307 = vld [vmem:[%s230 + $0xc8] sm:$0xff]
        %v308 = vld [vmem:[%s230 + $0xd0] sm:$0xff]
        %v309 = vld [vmem:[%s230 + $0xd8] sm:$0xff]
        %v310 = vld [vmem:[%s230 + $0xe0] sm:$0xff]
        %v311 = vld [vmem:[%s230 + $0xe8] sm:$0xff]
        %v312 = vld [vmem:[%s230 + $0xf0] sm:$0xff]
        %v313 = vld [vmem:[%s230 + $0xf8] sm:$0xff]
        %v316 = vunpack.c.l.b16 %v280
        %v317 = vunpack.c.h.b16 %v280
        %v318 = vunpack.c.l.b16 %v281
        %v319 = vunpack.c.h.b16 %v281
        %v320 = vpack.c.b16 %v318, %v316
        %v321 = vpack.c.b16 %v319, %v317
        %v356 = vunpack.c.l.b16 %v282
        %v357 = vunpack.c.h.b16 %v282
        %v358 = vunpack.c.l.b16 %v283
        %v359 = vunpack.c.h.b16 %v283
        %v360 = vunpack.c.l.b16 %v284
        %v361 = vunpack.c.h.b16 %v284
        %v362 = vunpack.c.l.b16 %v285
        %v363 = vunpack.c.h.b16 %v285
        %v364 = vunpack.c.l.b16 %v286
        %v365 = vunpack.c.h.b16 %v286
        %v366 = vunpack.c.l.b16 %v287
        %v367 = vunpack.c.h.b16 %v287
        %v368 = vunpack.c.l.b16 %v288
        %v369 = vunpack.c.h.b16 %v288
        %v370 = vunpack.c.l.b16 %v289
        %v371 = vunpack.c.h.b16 %v289
        %v372 = vunpack.c.l.b16 %v290
        %v373 = vunpack.c.h.b16 %v290
        %v374 = vunpack.c.l.b16 %v291
        %v375 = vunpack.c.h.b16 %v291
        %v376 = vunpack.c.l.b16 %v292
        %v377 = vunpack.c.h.b16 %v292
        %v378 = vunpack.c.l.b16 %v293
        %v379 = vunpack.c.h.b16 %v293
        %v380 = vunpack.c.l.b16 %v294
        %v381 = vunpack.c.h.b16 %v294
        %v382 = vunpack.c.l.b16 %v295
        %v383 = vunpack.c.h.b16 %v295
        %v384 = vunpack.c.l.b16 %v296
        %v385 = vunpack.c.h.b16 %v296
        %v386 = vunpack.c.l.b16 %v297
        %v387 = vunpack.c.h.b16 %v297
        %v388 = vunpack.c.l.b16 %v298
        %v389 = vunpack.c.h.b16 %v298
        %v390 = vunpack.c.l.b16 %v299
        %v391 = vunpack.c.h.b16 %v299
        %v392 = vunpack.c.l.b16 %v300
        %v393 = vunpack.c.h.b16 %v300
        %v394 = vunpack.c.l.b16 %v301
        %v395 = vunpack.c.h.b16 %v301
        %v396 = vunpack.c.l.b16 %v302
        %v397 = vunpack.c.h.b16 %v302
        %v398 = vunpack.c.l.b16 %v303
        %v399 = vunpack.c.h.b16 %v303
        %v400 = vunpack.c.l.b16 %v304
        %v401 = vunpack.c.h.b16 %v304
        %v402 = vunpack.c.l.b16 %v305
        %v403 = vunpack.c.h.b16 %v305
        %v404 = vunpack.c.l.b16 %v306
        %v405 = vunpack.c.h.b16 %v306
        %v406 = vunpack.c.l.b16 %v307
        %v407 = vunpack.c.h.b16 %v307
        %v408 = vunpack.c.l.b16 %v308
        %v409 = vunpack.c.h.b16 %v308
        %v410 = vunpack.c.l.b16 %v309
        %v411 = vunpack.c.h.b16 %v309
        %v412 = vunpack.c.l.b16 %v310
        %v413 = vunpack.c.h.b16 %v310
        %v414 = vunpack.c.l.b16 %v311
        %v415 = vunpack.c.h.b16 %v311
        %v416 = vunpack.c.l.b16 %v312
        %v417 = vunpack.c.h.b16 %v312
        %v418 = vunpack.c.l.b16 %v313
        %v419 = vunpack.c.h.b16 %v313
        %v420 = vpack.c.b16 %v358, %v356
        %v421 = vpack.c.b16 %v359, %v357
        %v422 = vpack.c.b16 %v362, %v360
        %v423 = vpack.c.b16 %v363, %v361
        %v424 = vpack.c.b16 %v366, %v364
        %v425 = vpack.c.b16 %v367, %v365
        %v426 = vpack.c.b16 %v370, %v368
        %v427 = vpack.c.b16 %v371, %v369
        %v428 = vpack.c.b16 %v374, %v372
        %v429 = vpack.c.b16 %v375, %v373
        %v430 = vpack.c.b16 %v378, %v376
        %v431 = vpack.c.b16 %v379, %v377
        %v432 = vpack.c.b16 %v382, %v380
        %v433 = vpack.c.b16 %v383, %v381
        %v434 = vpack.c.b16 %v386, %v384
        %v435 = vpack.c.b16 %v387, %v385
        %v436 = vpack.c.b16 %v390, %v388
        %v437 = vpack.c.b16 %v391, %v389
        %v438 = vpack.c.b16 %v394, %v392
        %v439 = vpack.c.b16 %v395, %v393
        %v440 = vpack.c.b16 %v398, %v396
        %v441 = vpack.c.b16 %v399, %v397
        %v442 = vpack.c.b16 %v402, %v400
        %v443 = vpack.c.b16 %v403, %v401
        %v444 = vpack.c.b16 %v406, %v404
        %v445 = vpack.c.b16 %v407, %v405
        %v446 = vpack.c.b16 %v410, %v408
        %v447 = vpack.c.b16 %v411, %v409
        %v448 = vpack.c.b16 %v414, %v412
        %v449 = vpack.c.b16 %v415, %v413
        %v450 = vpack.c.b16 %v418, %v416
        %v451 = vpack.c.b16 %v419, %v417
        %484 = vmatprep.subr.bf16.mxu0 %v421
        %485 = vmatpush1.bf16.msra.mxu0 %v420
        %486 = vmatprep.subr.bf16.mxu0 %v423
        %487 = vmatpush1.bf16.msra.mxu0 %v422
        %488 = vmatprep.subr.bf16.mxu0 %v425
        %489 = vmatpush1.bf16.msra.mxu0 %v424
        %490 = vmatprep.subr.bf16.mxu0 %v427
        %491 = vmatpush1.bf16.msra.mxu0 %v426
        %492 = vmatprep.subr.bf16.mxu0 %v429
        %493 = vmatpush1.bf16.msra.mxu0 %v428
        %494 = vmatprep.subr.bf16.mxu0 %v431
        %495 = vmatpush1.bf16.msra.mxu0 %v430
        %496 = vmatprep.subr.bf16.mxu0 %v433
        %497 = vmatpush1.bf16.msra.mxu0 %v432
        %498 = vmatprep.subr.bf16.mxu0 %v435
        %499 = vmatpush1.bf16.msra.mxu0 %v434
        %500 = vmatprep.subr.bf16.mxu0 %v437
        %501 = vmatpush1.bf16.msra.mxu0 %v436
        %502 = vmatprep.subr.bf16.mxu0 %v439
        %503 = vmatpush1.bf16.msra.mxu0 %v438
        %504 = vmatprep.subr.bf16.mxu0 %v441
        %505 = vmatpush1.bf16.msra.mxu0 %v440
        %506 = vmatprep.subr.bf16.mxu0 %v443
        %507 = vmatpush1.bf16.msra.mxu0 %v442
        %508 = vmatprep.subr.bf16.mxu0 %v445
        %509 = vmatpush1.bf16.msra.mxu0 %v444
        %510 = vmatprep.subr.bf16.mxu0 %v447
        %511 = vmatpush1.bf16.msra.mxu0 %v446
        %512 = vmatprep.subr.bf16.mxu0 %v449
        %513 = vmatpush1.bf16.msra.mxu0 %v448
        %514 = vmatprep.subr.bf16.mxu0 %v451
        %515 = vmatpush1.bf16.msra.mxu0 %v450
        %516 = vmatprep.mubr.bf16.mxu0 %v321
        %517 = vmatmul.mubr.bf16.gmra.mrb[0].mxu0 %v320
        %v518 = vpop.f32.mrb[0].mxu0
        %v519 = vadd.f32 0.0, %v518
        %v520 = vpop.f32.mrb[0].mxu0
        %v521 = vadd.f32 0.0, %v520
        %v522 = vpop.f32.mrb[0].mxu0
        %v523 = vadd.f32 0.0, %v522
        %v524 = vpop.f32.mrb[0].mxu0
        %v525 = vadd.f32 0.0, %v524
        %526 = vdwg.mxu0
        %v527 = vadd.f32 %v276, %v519
        %v528 = vadd.f32 %v277, %v521
        %v529 = vadd.f32 %v278, %v523
        %v530 = vadd.f32 %v279, %v525
        %531 = vst [vmem:[#allocation2] sm:$0xff] %v527
        %532 = vst [vmem:[#allocation2 + $0x8] sm:$0xff] %v528
        %533 = vst [vmem:[#allocation2 + $0x10] sm:$0xff] %v529
        %534 = vst [vmem:[#allocation2 + $0x18] sm:$0xff] %v530
        // Predicated region
        $region45: #{tpu_custom_call.1} parent=31 // pred_check
          %p535 = pneg %p268
        $region46: #{tpu_custom_call.1} parent=31 // pred_check_branch
          %537 = sbr.rel (%p535) target = $region48
        $region47: #{tpu_custom_call.1} parent=31 // pred_region
          %v538 = vld [vmem:[#allocation2] sm:$0xff]
          %v539 = vld [vmem:[#allocation2 + $0x8] sm:$0xff]
          %v540 = vld [vmem:[#allocation2 + $0x10] sm:$0xff]
          %v541 = vld [vmem:[#allocation2 + $0x18] sm:$0xff]
          %v542 = vld [vmem:[%s264] sm:$0x3]
          %v544 = vlaneseq
          %v545 = vshrl.u32 %v544, 7
          %v546 = vsub.s32 0, %v545
          %v547 = vrot.slane %v542, %v546
          %v548 = vlaneseq
          %v549 = vshrl.u32 %v548, 7
          %v550 = vsub.s32 1, %v549
          %v551 = vrot.slane %v542, %v550
          %v554 = vadd.f32 %v538, %v547
          %v555 = vadd.f32 %v539, %v551
          %v556 = vadd.f32 %v540, %v547
          %v557 = vadd.f32 %v541, %v551
          %v558 = vpack.c.bf16 %v556, %v554
          %v559 = vpack.c.bf16 %v557, %v555
          %v562 = vunpack.c.l.b16 %v558
          %v563 = vunpack.c.l.b16 %v559
          %v564 = vunpack.c.h.b16 %v558
          %v565 = vunpack.c.h.b16 %v559
          %v566 = vpack.c.b16 %v563, %v562
          %v567 = vpack.c.b16 %v565, %v564
          %570 = vst [vmem:[%s256] sm:$0xff] %v566
          %571 = vst [vmem:[%s256 + $0x8] sm:$0xff] %v567
        $region48: #{tpu_custom_call.1} parent=31 // pred_fallthru
          _
        %s572 = sand.u32 %s132, 1
        %s573 = scalar_lea.sflag [#allocation5], %s572
        %s574 = sand.u32 %s132, 1
        %s575 = smul.addr %s574, 16
        %s576 = scalar_lea.vmem [#allocation8], %s575
        // Predicated region
        $region49: #{tpu_custom_call.1} parent=31 // pred_check
          %p577 = pneg %p142
        $region50: #{tpu_custom_call.1} parent=31 // pred_check_branch
          %579 = sbr.rel (%p577) target = $region52
        $region51: #{tpu_custom_call.1} parent=31 // pred_region
          %s580 = smul.u32 2, %s26
          %s581 = smul.u32 2, %s27
          %s583 = ssub.s32 256, 256
          %584 = vsyncadd %s573, %s583
          %s585 = smul.addr %s580, 6
          %s586 = sadd.s32 %s581, %s585
          %s587 = smul.addr %s586, 64
          %s588 = scalar_lea.hbm %s3, %s587
          %s589 = sshll.u32 %s576, 4
          %s590 = int_to_ptr.vmem [resolvable:$true] %s589
          %595 = dma.vmem_to_hbm [thread:$0]  %s590, 256, %s588, %s573, 128, 384, 8
        $region52: #{tpu_custom_call.1} parent=31 // pred_fallthru
          _
      $region32: #{tpu_custom_call.1} parent=5 // pred_fallthru
        _
      %p596 = scmp.le.s32.totalorder 2, %s16
      // Predicated region
      $region53: #{tpu_custom_call.1} parent=5 // pred_check
        %p597 = pneg %p596
      $region54: #{tpu_custom_call.1} parent=5 // pred_check_branch
        %599 = sbr.rel (%p597) target = $region56
      $region55: #{tpu_custom_call.1} parent=5 // pred_region
        %s600 = ssub.s32 %s16, 2
        // Predicated region
        $region57: #{tpu_custom_call.1} parent=55 // pred_check
          %p601 = pneg %p148
        $region58: #{tpu_custom_call.1} parent=55 // pred_check_branch
          %603 = sbr.rel (%p601) target = $region60
        $region59: #{tpu_custom_call.1} parent=55 // pred_region
          %s604 = sand.u32 %s133, 1
          %s605 = scalar_lea.sflag [#allocation5], %s604
          %s606 = sand.u32 %s133, 1
          %s607 = smul.addr %s606, 16
          %s608 = scalar_lea.vmem [#allocation8], %s607
          %609 = dma.done %s605, 256
        $region60: #{tpu_custom_call.1} parent=55 // pred_fallthru
          _
      $region56: #{tpu_custom_call.1} parent=5 // pred_fallthru
        _
    $region6: #{tpu_custom_call.1} parent=1 // loop_footer
      %s20 = sadd.s32 1, %s16
    $region7: #{tpu_custom_call.1} parent=1 // loop_footer_branch
      %15 = sbr.rel target = $region3
    $region8: #{tpu_custom_call.1} parent=1 // loop_exit
      _
    %610 = vsyncpa [#allocation4], 1
    %s611 = scalar_lea.sflag [#allocation4], 1
    %612 = vsyncpa %s611, 1
    %613 = vsyncpa [#allocation7], 1
    %s614 = scalar_lea.sflag [#allocation7], 1
    %615 = vsyncpa %s614, 1
    %616 = vsyncpa [#allocation5], 1
    %s617 = scalar_lea.sflag [#allocation5], 1
    %618 = vsyncpa %s617, 1

</llo_original>
